<compile_context>
chip_gen: v5e
topology: v5e:2x2
jax: 0.10.0
libtpu: 0.0.40
codegen_flags: <defaults>
</compile_context>

<pallas_src>
import functools

import jax
import jax.numpy as jnp
from jax import lax
from jax.experimental import pallas as pl
from jax.experimental.pallas import tpu as pltpu

LANES = 128            # lane width of the 2-D slab view
MAX_TILE_ROWS = 4096   # 4096 x 128 x 4B = 2 MiB f32 block per input per step


def _round_up(x, m):
    return ((x + m - 1) // m) * m


def _kl_sq_sum_kernel(o_ref, t_ref, out_ref, *,
                      rows, tile_rows, tiles_per_chunk, n_full_tiles):
    """Accumulate sum((o - t)^2) of this chunk into its (8, 128) output block."""
    c = pl.program_id(0)
    t = pl.program_id(1)

    @pl.when(t == 0)
    def _init():
        out_ref[...] = jnp.zeros_like(out_ref)

    g = c * tiles_per_chunk + t                         # global tile index
    d = o_ref[...].astype(jnp.float32) - t_ref[...].astype(jnp.float32)
    sq = d * d

    # Hot path: fully-valid tiles, unmasked vreg-wise accumulation (VPU only).
    @pl.when(g < n_full_tiles)
    def _full():
        out_ref[...] += jnp.sum(sq.reshape(-1, 8, LANES), axis=0)

    # Cold path: partial last tile and dummy tiles.  Keep this a select (not a
    # multiply) so OOB-padded garbage rows (possibly NaN/Inf) are zeroed.
    @pl.when(g >= n_full_tiles)
    def _partial():
        valid_rows = rows - g * tile_rows               # <= 0 for dummy tiles
        row_ids = lax.broadcasted_iota(jnp.int32, (tile_rows, LANES), 0)
        masked = jnp.where(row_ids < valid_rows, sq, 0.0)
        out_ref[...] += jnp.sum(masked.reshape(-1, 8, LANES), axis=0)


def _num_tensorcores_per_device():
    # v5e/v6e expose 1 TensorCore per device; v4/v7x-style chips expose 2.
    # Heuristic string match; default to 1 (always safe/correct).
    try:
        kind = jax.devices()[0].device_kind.lower()
    except Exception:
        return 1
    if "v7" in kind or "v4" in kind:
        return 2
    return 1


def _sq_diff_sum_pallas(o2, t2, rows, tile_rows, n_tiles, num_chunks):
    tiles_per_chunk = pl.cdiv(n_tiles, num_chunks)
    n_full_tiles = rows // tile_rows

    def in_map(c, k):
        # Clamp dummy tiles onto the last real tile; the kernel masks them out.
        return (jnp.minimum(c * tiles_per_chunk + k, n_tiles - 1), 0)

    kernel = functools.partial(
        _kl_sq_sum_kernel,
        rows=rows, tile_rows=tile_rows,
        tiles_per_chunk=tiles_per_chunk, n_full_tiles=n_full_tiles)

    def run(dim_semantics):
        return pl.pallas_call(
            kernel,
            out_shape=jax.ShapeDtypeStruct((num_chunks * 8, LANES), jnp.float32),
            grid_spec=pltpu.PrefetchScalarGridSpec(
                num_scalar_prefetch=0,
                grid=(num_chunks, tiles_per_chunk),
                in_specs=[
                    pl.BlockSpec((tile_rows, LANES), in_map),
                    pl.BlockSpec((tile_rows, LANES), in_map),
                ],
                out_specs=pl.BlockSpec((8, LANES), lambda c, k: (c, 0)),
            ),
            compiler_params=pltpu.CompilerParams(
                dimension_semantics=dim_semantics),
        )(o2, t2)

    if num_chunks > 1:
        # Only CORE_PARALLEL actually shards a grid axis across TensorCores.
        try:
            return jax.block_until_ready(
                run((pltpu.CORE_PARALLEL, pltpu.ARBITRARY)))
        except Exception:
            return run(("parallel", "arbitrary"))
    return run(("arbitrary", "arbitrary"))


def kl_divergence_loss(output, target):
    assert output.shape == target.shape, "output/target shapes must match"
    n = output.size

    o = output.reshape(-1)
    t = target.reshape(-1)

    n_main = (n // LANES) * LANES
    rows = n_main // LANES

    # Sub-128-element lane tail: handled in plain JAX (tiny).
    if n_main != n:
        od = o[n_main:].astype(jnp.float32)
        td = t[n_main:].astype(jnp.float32)
        tail_sum = jnp.sum((od - td) * (od - td))
    else:
        tail_sum = jnp.float32(0.0)

    if rows == 0:
        total = tail_sum
    else:
        # Free (no copy) when n % LANES == 0; otherwise the prefix slice is
        # materialized once by XLA (unavoidable without in-kernel gather).
        o2 = o[:n_main].reshape(rows, LANES)
        t2 = t[:n_main].reshape(rows, LANES)

        # Block row count: multiple of 8 (legal (8,128) tiling), capped at 2 MiB.
        tile_rows = min(MAX_TILE_ROWS, _round_up(rows, 8))
        n_tiles = pl.cdiv(rows, tile_rows)

        # Use both TensorCores only when the chip has them AND there is enough
        # work to split; this also avoids dummy-tile refetch for tiny inputs.
        num_chunks = 2 if (_num_tensorcores_per_device() >= 2 and n_tiles >= 2) else 1

        partials = _sq_diff_sum_pallas(o2, t2, rows, tile_rows, n_tiles, num_chunks)
        total = jnp.sum(partials) + tail_sum

    # 0.5 factor of the Gaussian KL and the mean are folded in here.
    return (0.5 * total / jnp.float32(n)).astype(jnp.float32)


if __name__ == "__main__":
    key = jax.random.PRNGKey(0)
    k1, k2, k3, k4 = jax.random.split(key, 4)

    # Primary small NCHW-like case consistent with the module.
    out1 = jax.random.normal(k1, (2, 4, 16, 16), dtype=jnp.float32)
    tgt1 = jax.random.normal(k2, (2, 4, 16, 16), dtype=jnp.float32)
    loss1 = kl_divergence_loss(out1, tgt1)
    jax.block_until_ready(loss1)
    ref1 = jnp.mean(0.5 * (out1 - tgt1) ** 2)
    assert jnp.allclose(loss1, ref1, rtol=1e-5, atol=1e-6), (loss1, ref1)

    # Odd-sized case: exercises the sub-lane tail (plain JAX) + masked partial tile.
    out2 = jax.random.normal(k3, (2, 7, 33), dtype=jnp.float32)
    tgt2 = jax.random.normal(k4, (2, 7, 33), dtype=jnp.float32)
    loss2 = kl_divergence_loss(out2, tgt2)
    jax.block_until_ready(loss2)
    ref2 = jnp.mean(0.5 * (out2 - tgt2) ** 2)
    assert jnp.allclose(loss2, ref2, rtol=1e-5, atol=1e-6), (loss2, ref2)

    print("KERNEL_OK")
</pallas_src>

<mosaic_0001>
module attributes {stable_mosaic.version = 11 : i64} {
  func.func @_kl_sq_sum_kernel(%arg0: i32, %arg1: i32, %arg2: memref<16x128xf32, #tpu.memory_space<vmem>>, %arg3: memref<16x128xf32, #tpu.memory_space<vmem>>, %arg4: memref<8x128xf32, #tpu.memory_space<vmem>>) attributes {dimension_semantics = [#tpu.dimension_semantics<arbitrary>, #tpu.dimension_semantics<arbitrary>], iteration_bounds = array<i64: 1, 1>, scalar_prefetch = 0 : i64, scratch_operands = 0 : i64, tpu.core_type = #tpu.core_type<tc>, window_params = [{transform_indices = @transform_0, window_bounds = array<i64: 16, 128>}, {transform_indices = @transform_1, window_bounds = array<i64: 16, 128>}, {transform_indices = @transform_2, window_bounds = array<i64: 8, 128>}]} {
    %c0_i32 = arith.constant 0 : i32
    %0 = arith.cmpi eq, %arg1, %c0_i32 : i32
    %1 = arith.extui %0 : i1 to i32
    %c0_i32_0 = arith.constant 0 : i32
    %2 = arith.cmpi ne, %1, %c0_i32_0 : i32
    scf.if %2 {
      %cst = arith.constant 0.000000e+00 : f32
      %15 = vector.broadcast %cst : f32 to vector<8x128xf32>
      %c0_8 = arith.constant 0 : index
      %c0_9 = arith.constant 0 : index
      %16 = vector.load %arg4[%c0_8, %c0_9] : memref<8x128xf32, #tpu.memory_space<vmem>>, vector<8x128xf32>
      tpu.vector_store %arg4[%c0_8, %c0_9], %15 {strides = array<i32>} : memref<8x128xf32, #tpu.memory_space<vmem>>, vector<8x128xf32>,
    } else {
    }
    %c1_i32 = arith.constant 1 : i32
    %3 = arith.muli %arg0, %c1_i32 : i32
    %4 = arith.addi %3, %arg1 : i32
    %c0 = arith.constant 0 : index
    %c0_1 = arith.constant 0 : index
    %5 = vector.load %arg2[%c0, %c0_1] : memref<16x128xf32, #tpu.memory_space<vmem>>, vector<16x128xf32>
    %c0_2 = arith.constant 0 : index
    %c0_3 = arith.constant 0 : index
    %6 = vector.load %arg3[%c0_2, %c0_3] : memref<16x128xf32, #tpu.memory_space<vmem>>, vector<16x128xf32>
    %7 = arith.subf %5, %6 : vector<16x128xf32>
    %8 = arith.mulf %7, %7 : vector<16x128xf32>
    %c1_i32_4 = arith.constant 1 : i32
    %9 = arith.cmpi slt, %4, %c1_i32_4 : i32
    %10 = arith.extui %9 : i1 to i32
    %c0_i32_5 = arith.constant 0 : i32
    %11 = arith.cmpi ne, %10, %c0_i32_5 : i32
    scf.if %11 {
      %c0_8 = arith.constant 0 : index
      %c0_9 = arith.constant 0 : index
      %15 = vector.load %arg4[%c0_8, %c0_9] : memref<8x128xf32, #tpu.memory_space<vmem>>, vector<8x128xf32>
      %16 = vector.shape_cast %8 : vector<16x128xf32> to vector<2x8x128xf32>
      %cst = arith.constant dense<0.000000e+00> : vector<8x128xf32>
      %17 = vector.multi_reduction <add>, %16, %cst [0] : vector<2x8x128xf32> to vector<8x128xf32>
      %18 = arith.addf %15, %17 : vector<8x128xf32>
      %c0_10 = arith.constant 0 : index
      %c0_11 = arith.constant 0 : index
      %19 = vector.load %arg4[%c0_10, %c0_11] : memref<8x128xf32, #tpu.memory_space<vmem>>, vector<8x128xf32>
      tpu.vector_store %arg4[%c0_10, %c0_11], %18 {strides = array<i32>} : memref<8x128xf32, #tpu.memory_space<vmem>>, vector<8x128xf32>,
    } else {
    }
    %c1_i32_6 = arith.constant 1 : i32
    %12 = arith.cmpi sge, %4, %c1_i32_6 : i32
    %13 = arith.extui %12 : i1 to i32
    %c0_i32_7 = arith.constant 0 : i32
    %14 = arith.cmpi ne, %13, %c0_i32_7 : i32
    scf.if %14 {
      %c16_i32 = arith.constant 16 : i32
      %15 = arith.muli %4, %c16_i32 : i32
      %c16_i32_8 = arith.constant 16 : i32
      %16 = arith.subi %c16_i32_8, %15 : i32
      %17 = tpu.iota {dimensions = array<i32: 0>} : vector<16x128xi32>
      %18 = vector.broadcast %16 : i32 to vector<16x128xi32>
      %19 = arith.cmpi slt, %17, %18 : vector<16x128xi32>
      %cst = arith.constant 0.000000e+00 : f32
      %20 = vector.broadcast %cst : f32 to vector<16x128xf32>
      %21 = arith.select %19, %8, %20 : vector<16x128xi1>, vector<16x128xf32>
      %c0_9 = arith.constant 0 : index
      %c0_10 = arith.constant 0 : index
      %22 = vector.load %arg4[%c0_9, %c0_10] : memref<8x128xf32, #tpu.memory_space<vmem>>, vector<8x128xf32>
      %23 = vector.shape_cast %21 : vector<16x128xf32> to vector<2x8x128xf32>
      %cst_11 = arith.constant dense<0.000000e+00> : vector<8x128xf32>
      %24 = vector.multi_reduction <add>, %23, %cst_11 [0] : vector<2x8x128xf32> to vector<8x128xf32>
      %25 = arith.addf %22, %24 : vector<8x128xf32>
      %c0_12 = arith.constant 0 : index
      %c0_13 = arith.constant 0 : index
      %26 = vector.load %arg4[%c0_12, %c0_13] : memref<8x128xf32, #tpu.memory_space<vmem>>, vector<8x128xf32>
      tpu.vector_store %arg4[%c0_12, %c0_13], %25 {strides = array<i32>} : memref<8x128xf32, #tpu.memory_space<vmem>>, vector<8x128xf32>,
    } else {
    }
    return
  }
  func.func @transform_0(%arg0: i32, %arg1: i32) -> (i32, i32) {
    %c1_i32 = arith.constant 1 : i32
    %0 = arith.muli %arg0, %c1_i32 : i32
    %1 = arith.addi %0, %arg1 : i32
    %c0_i32 = arith.constant 0 : i32
    %2 = arith.minsi %1, %c0_i32 : i32
    %c0_i32_0 = arith.constant 0 : i32
    %c0_i32_1 = arith.constant 0 : i32
    return %2, %c0_i32_0 : i32, i32
  }
  func.func @transform_1(%arg0: i32, %arg1: i32) -> (i32, i32) {
    %c1_i32 = arith.constant 1 : i32
    %0 = arith.muli %arg0, %c1_i32 : i32
    %1 = arith.addi %0, %arg1 : i32
    %c0_i32 = arith.constant 0 : i32
    %2 = arith.minsi %1, %c0_i32 : i32
    %c0_i32_0 = arith.constant 0 : i32
    %c0_i32_1 = arith.constant 0 : i32
    return %2, %c0_i32_0 : i32, i32
  }
  func.func @transform_2(%arg0: i32, %arg1: i32) -> (i32, i32) {
    %c0_i32 = arith.constant 0 : i32
    %c0_i32_0 = arith.constant 0 : i32
    return %arg0, %c0_i32 : i32, i32
  }
}

</mosaic_0001>

<llo_original>
// kernel: tpu_custom_call.1
$region0: #{tpu_custom_call.1}
  #allocation0 [shape = 'u32[]', space=smem, size = 0x4, offset = 0x4, fixed_abs, tag = 'smem constant byte address 0x4 - core index']
  #allocation1 [shape = 'u32[72,128]{1,0:T(1,128)}', space=vmem, size = 0x9000, scoped, tag = 'internal scratch']
  %s0 = inlined_call_operand.hbm [shape: f32[16,128], index: 0, kind: input, shape index: {}]
  %s1 = inlined_call_operand.hbm [shape: f32[16,128], index: 1, kind: input, shape index: {}]
  %s2 = inlined_call_operand.hbm [shape: f32[8,128], index: 2, kind: output, shape index: {}]
  %s3 = sld [smem:[#allocation0]]
  $region38: #{tpu_custom_call.1} parent=0
    _
  %s5 = ssub.s32 1, %s3
  %s6 = scalar_select 0, %s5, %s3
  $region1: #{tpu_custom_call.1} parent=0
    #allocation2 [shape = 'u8[8192]{0}', space=vmem, size = 0x2000, scoped, tag = 'input window, operand 0, single buffered']
    #allocation3 [shape = 's32[1]{0}', space=sflag, size = 0x4, scoped, tag = 'scoped memory for tpu_custom_call.1']
    #allocation4 [shape = 's32[1]{0}', space=sflag, size = 0x4, scoped, tag = 'scoped memory for tpu_custom_call.1']
    #allocation5 [shape = 'u8[8192]{0}', space=vmem, size = 0x2000, scoped, tag = 'input window, operand 1, single buffered']
    #allocation6 [shape = 's32[1]{0}', space=sflag, size = 0x4, scoped, tag = 'scoped memory for tpu_custom_call.1']
    #allocation7 [shape = 'u8[4096]{0}', space=vmem, size = 0x1000, scoped, tag = 'output window, operand 0, single buffered']
    %7 = vsyncpa [#allocation3], 0
    %8 = vsyncpa [#allocation6], 0
    %9 = vsyncpa [#allocation4], 0
    // Predicated region
    $region2: #{tpu_custom_call.1} parent=1 // pred_check
      _
    $region3: #{tpu_custom_call.1} parent=1 // pred_check_branch
      %11 = sbr.rel (0) target = $region5
    $region4: #{tpu_custom_call.1} parent=1 // pred_region
      %s12 = sadd.s32 0, 0
      %p13 = scmp.lt.s32.totalorder %s12, 0
      %s14 = scalar_select %p13, %s12, 0
      %s15 = smul.u32 2, %s14
      %17 = vsyncadd [#allocation3], 0
      %s18 = smul.addr %s15, 8
      %s19 = scalar_lea.hbm %s0, %s18
      %s20 = sshll.u32 %s19, 4
      %s21 = int_to_ptr.hbm [resolvable:$true] %s20
      %s22 = sshll.u32 [#allocation2], 4
      %s23 = int_to_ptr.vmem [resolvable:$true] %s22
      %28 = dma.hbm_to_vmem [thread:$0]  %s21, 256, %s23, [#allocation3], 128, 128, 8
    $region5: #{tpu_custom_call.1} parent=1 // pred_fallthru
      _
    // Predicated region
    $region6: #{tpu_custom_call.1} parent=1 // pred_check
      _
    $region7: #{tpu_custom_call.1} parent=1 // pred_check_branch
      %30 = sbr.rel (0) target = $region9
    $region8: #{tpu_custom_call.1} parent=1 // pred_region
      %s31 = sadd.s32 0, 0
      %p32 = scmp.lt.s32.totalorder %s31, 0
      %s33 = scalar_select %p32, %s31, 0
      %s34 = smul.u32 2, %s33
      %36 = vsyncadd [#allocation6], 0
      %s37 = smul.addr %s34, 8
      %s38 = scalar_lea.hbm %s1, %s37
      %s39 = sshll.u32 %s38, 4
      %s40 = int_to_ptr.hbm [resolvable:$true] %s39
      %s41 = sshll.u32 [#allocation5], 4
      %s42 = int_to_ptr.vmem [resolvable:$true] %s41
      %47 = dma.hbm_to_vmem [thread:$0]  %s40, 256, %s42, [#allocation6], 128, 128, 8
    $region9: #{tpu_custom_call.1} parent=1 // pred_fallthru
      _
    // Predicated region
    $region10: #{tpu_custom_call.1} parent=1 // pred_check
      _
    $region11: #{tpu_custom_call.1} parent=1 // pred_check_branch
      %49 = sbr.rel (0) target = $region13
    $region12: #{tpu_custom_call.1} parent=1 // pred_region
      %51 = dma.done [#allocation3], 256
    $region13: #{tpu_custom_call.1} parent=1 // pred_fallthru
      _
    // Predicated region
    $region14: #{tpu_custom_call.1} parent=1 // pred_check
      _
    $region15: #{tpu_custom_call.1} parent=1 // pred_check_branch
      %53 = sbr.rel (0) target = $region17
    $region16: #{tpu_custom_call.1} parent=1 // pred_region
      %55 = dma.done [#allocation6], 256
    $region17: #{tpu_custom_call.1} parent=1 // pred_fallthru
      _
    %s56 = sadd.s32 0, 0
    %p57 = scmp.lt.s32.totalorder %s56, 0
    %s58 = scalar_select %p57, %s56, 0
    %s59 = smul.u32 2, %s58
    %s60 = sadd.s32 0, 0
    %p61 = scmp.lt.s32.totalorder %s60, 0
    %s62 = scalar_select %p61, %s60, 0
    %s63 = smul.u32 2, %s62
    %p64 = scmp.eq.s32.totalorder 0, 0
    // Predicated region
    $region18: #{tpu_custom_call.1} parent=1 // pred_check
      %p65 = pneg %p64
    $region19: #{tpu_custom_call.1} parent=1 // pred_check_branch
      %67 = sbr.rel (%p65) target = $region21
    $region20: #{tpu_custom_call.1} parent=1 // pred_region
      %68 = vst [vmem:[#allocation7] sm:$0xff] 0.0
    $region21: #{tpu_custom_call.1} parent=1 // pred_fallthru
      _
    %s69 = sadd.s32 0, 0
    %v70 = vld [vmem:[#allocation2] sm:$0xff]
    %v71 = vld [vmem:[#allocation2 + $0x8] sm:$0xff]
    %v72 = vld [vmem:[#allocation5] sm:$0xff]
    %v73 = vld [vmem:[#allocation5 + $0x8] sm:$0xff]
    %v74 = vsub.f32 %v70, %v72
    %v75 = vsub.f32 %v71, %v73
    %v76 = vmul.f32 %v74, %v74
    %v77 = vmul.f32 %v75, %v75
    %p78 = scmp.lt.s32.totalorder %s69, 1
    // Predicated region
    $region22: #{tpu_custom_call.1} parent=1 // pred_check
      %p79 = pneg %p78
    $region23: #{tpu_custom_call.1} parent=1 // pred_check_branch
      %81 = sbr.rel (%p79) target = $region25
    $region24: #{tpu_custom_call.1} parent=1 // pred_region
      %v82 = vld [vmem:[#allocation7] sm:$0xff]
      %v83 = vadd.f32 %v76, %v77
      %v84 = vadd.f32 %v82, %v83
      %85 = vst [vmem:[#allocation7] sm:$0xff] %v84
    $region25: #{tpu_custom_call.1} parent=1 // pred_fallthru
      _
    %p86 = scmp.ge.s32.totalorder %s69, 1
    // Predicated region
    $region26: #{tpu_custom_call.1} parent=1 // pred_check
      %p87 = pneg %p86
    $region27: #{tpu_custom_call.1} parent=1 // pred_check_branch
      %89 = sbr.rel (%p87) target = $region29
    $region28: #{tpu_custom_call.1} parent=1 // pred_region
      %s90 = smul.u32 %s69, 16
      %s91 = ssub.s32 16, %s90
      %v92 = vlaneseq
      %v93 = vshrl.u32 %v92, 7
      %v94 = vadd.s32 %v93, 8
      %v95 = vstv %s91
      %vm96 = vcmp.lt.s32.totalorder %v93, %v95
      %vm97 = vcmp.lt.s32.totalorder %v94, %v95
      %v98 = vsel %vm96, %v76, 0.0
      %v99 = vsel %vm97, %v77, 0.0
      %v100 = vld [vmem:[#allocation7] sm:$0xff]
      %v101 = vadd.f32 %v98, %v99
      %v102 = vadd.f32 %v100, %v101
      %103 = vst [vmem:[#allocation7] sm:$0xff] %v102
    $region29: #{tpu_custom_call.1} parent=1 // pred_fallthru
      _
    // Predicated region
    $region30: #{tpu_custom_call.1} parent=1 // pred_check
      _
    $region31: #{tpu_custom_call.1} parent=1 // pred_check_branch
      %105 = sbr.rel (0) target = $region33
    $region32: #{tpu_custom_call.1} parent=1 // pred_region
      %107 = vsyncadd [#allocation4], 0
      %s109 = sshll.u32 [#allocation7], 4
      %s110 = int_to_ptr.vmem [resolvable:$true] %s109
      %s111 = sshll.u32 %s2, 4
      %s112 = int_to_ptr.hbm [resolvable:$true] %s111
      %114 = dma.vmem_to_hbm [thread:$0]  %s110, 128, %s112, [#allocation4]
    $region33: #{tpu_custom_call.1} parent=1 // pred_fallthru
      _
    // Predicated region
    $region34: #{tpu_custom_call.1} parent=1 // pred_check
      _
    $region35: #{tpu_custom_call.1} parent=1 // pred_check_branch
      %116 = sbr.rel (0) target = $region37
    $region36: #{tpu_custom_call.1} parent=1 // pred_region
      %118 = dma.done [#allocation4], 128
    $region37: #{tpu_custom_call.1} parent=1 // pred_fallthru
      _
    %119 = vsyncpa [#allocation3], 1
    %120 = vsyncpa [#allocation6], 1
    %121 = vsyncpa [#allocation4], 1

</llo_original>
